<compile_context>
chip_gen: v5e
topology: v5e:2x2
jax: 0.10.0
libtpu: 0.0.40
codegen_flags: <defaults>
</compile_context>

<pallas_src>
import jax
import jax.numpy as jnp
from jax.experimental import pallas as pl
from jax.experimental.pallas import tpu as pltpu

EPS = 1e-5

# Tap offsets (dy, dx) for a 3x3 kernel with padding=1, row-major order.
_TAPS = [(dy - 1, dx - 1) for dy in range(3) for dx in range(3)]


def _border_masks(H, W):
    """(9, H*W) float32 masks: 1 where tap (dy,dx) reads inside the image."""
    HW = H * W
    pos = jnp.arange(HW, dtype=jnp.int32)
    row = pos // W
    col = pos % W
    masks = []
    for oy, ox in _TAPS:
        ok = jnp.ones((HW,), dtype=bool)
        if oy == -1:
            ok = ok & (row >= 1)          # needs a row above
        elif oy == 1:
            ok = ok & (row <= H - 2)      # needs a row below
        if ox == -1:
            ok = ok & (col >= 1)          # needs a column to the left
        elif ox == 1:
            ok = ok & (col <= W - 2)      # needs a column to the right
        masks.append(ok)
    return jnp.stack(masks, axis=0).astype(jnp.float32)


def _make_fused_kernel(H, W):
    """Fused (conv3x3 + bias + InstanceNorm + ReLU) x 2 for one batch element.

    Layout: channels on sublanes, flattened spatial (H*W) on lanes.
    """
    HW = H * W
    inv_hw = 1.0 / HW

    def kernel(x_ref, w1_ref, b1_ref, w2_ref, b2_ref, m_ref, o_ref):
        # x_ref : (1, C, HW)   flattened NCHW input tile
        # w1_ref: (O, 9*C)     im2col weights, cols ordered (dy, dx, c)
        # b1_ref: (O, 1)
        # w2_ref: (O, 9*O)
        # b2_ref: (O, 1)
        # m_ref : (9, HW)      precomputed 0/1 border masks (one row per tap)
        # o_ref : (1, O, HW)   flattened NCHW output tile
        masks = m_ref[...]                               # (9, HW)

        def stage(x, w_mat, b):
            # x: (C_in, HW); w_mat: (O, 9*C_in); b: (O, 1)
            cols = []
            for i, (oy, ox) in enumerate(_TAPS):
                k = oy * W + ox                          # want x[p + k]
                if k == 0:
                    r = x
                else:
                    r = pltpu.roll(x, (-k) % HW, axis=1)  # out[p] = x[p + k]
                if (oy, ox) != (0, 0):
                    r = r * masks[i:i + 1, :]            # zero out-of-bounds lanes
                cols.append(r)
            im2col = jnp.concatenate(cols, axis=0)       # (9*C_in, HW)
            # Single MXU dot per stage; lane-dense (O, HW) result.
            y = jnp.dot(w_mat, im2col, preferred_element_type=jnp.float32)
            y = y + b
            # InstanceNorm2d (affine=False): single-pass mean/var over spatial.
            s1 = jnp.sum(y, axis=1, keepdims=True)
            s2 = jnp.sum(y * y, axis=1, keepdims=True)
            mean = s1 * inv_hw
            var = jnp.maximum(s2 * inv_hw - mean * mean, 0.0)
            y = (y - mean) * jax.lax.rsqrt(var + EPS)
            # ReLU
            y = jnp.maximum(y, 0.0)
            # TODO(synk): Dropout2d implemented as eval-mode identity; training
            # mode per-channel stochastic drop omitted.
            return y

        x = x_ref[0].astype(jnp.float32)                 # (C, HW)
        y1 = stage(x, w1_ref[...], b1_ref[...])          # (O, HW) stays on-chip
        y2 = stage(y1, w2_ref[...], b2_ref[...])         # (O, HW)
        o_ref[0] = y2.astype(o_ref.dtype)

    return kernel


def _weight_to_mat(w):
    """(O, C, 3, 3) PyTorch OIHW conv weight -> (O, 9*C), cols ordered (dy, dx, c)."""
    O, C = w.shape[0], w.shape[1]
    return jnp.transpose(w, (0, 2, 3, 1)).reshape(O, 9 * C)


@jax.jit
def conv_block_forward(x_nchw, w1, b1, w2, b2):
    """Pallas implementation of ConvBlock.forward. Input/output layout: NCHW."""
    N, C, H, W = x_nchw.shape
    O = w1.shape[0]
    HW = H * W

    x_flat = x_nchw.reshape(N, C, HW).astype(jnp.float32)  # free reshape, no transpose
    w1m = _weight_to_mat(w1).astype(jnp.float32)            # (O, 9*C)
    w2m = _weight_to_mat(w2).astype(jnp.float32)            # (O, 9*O)
    b1c = b1.reshape(O, 1).astype(jnp.float32)
    b2c = b2.reshape(O, 1).astype(jnp.float32)
    masks = _border_masks(H, W)                              # (9, HW), constant-folded

    out = pl.pallas_call(
        _make_fused_kernel(H, W),
        out_shape=jax.ShapeDtypeStruct((N, O, HW), jnp.float32),
        grid=(N,),
        in_specs=[
            pl.BlockSpec((1, C, HW), lambda n: (n, 0, 0)),
            pl.BlockSpec((O, 9 * C), lambda n: (0, 0)),
            pl.BlockSpec((O, 1), lambda n: (0, 0)),
            pl.BlockSpec((O, 9 * O), lambda n: (0, 0)),
            pl.BlockSpec((O, 1), lambda n: (0, 0)),
            pl.BlockSpec((9, HW), lambda n: (0, 0)),
        ],
        out_specs=pl.BlockSpec((1, O, HW), lambda n: (n, 0, 0)),
        compiler_params=pltpu.CompilerParams(
            dimension_semantics=("parallel",)),
    )(x_flat, w1m, b1c, w2m, b2c, masks)

    return out.reshape(N, O, H, W)                           # free reshape -> NCHW


def _reference_forward(x_nchw, w1, b1, w2, b2):
    """Pure-JAX reference for validation."""
    def stage(x, w, b):
        y = jax.lax.conv_general_dilated(
            x, w, window_strides=(1, 1), padding=((1, 1), (1, 1)),
            dimension_numbers=("NCHW", "OIHW", "NCHW"))
        y = y + b[None, :, None, None]
        mean = jnp.mean(y, axis=(2, 3), keepdims=True)
        var = jnp.mean((y - mean) ** 2, axis=(2, 3), keepdims=True)
        y = (y - mean) * jax.lax.rsqrt(var + EPS)
        return jnp.maximum(y, 0.0)

    y = stage(x_nchw.astype(jnp.float32), w1, b1)
    return stage(y, w2, b2)


if __name__ == "__main__":
    # batch=2, in_chans=4, out_chans=8, spatial 16x16, drop_prob=0.1 (eval mode).
    N, C_IN, C_OUT, H, W = 2, 4, 8, 16, 16

    key = jax.random.PRNGKey(0)
    kx, kw1, kb1, kw2, kb2 = jax.random.split(key, 5)

    x = jax.random.normal(kx, (N, C_IN, H, W), dtype=jnp.float32)
    w1 = jax.random.normal(kw1, (C_OUT, C_IN, 3, 3), dtype=jnp.float32) * 0.1
    b1 = jax.random.normal(kb1, (C_OUT,), dtype=jnp.float32) * 0.01
    w2 = jax.random.normal(kw2, (C_OUT, C_OUT, 3, 3), dtype=jnp.float32) * 0.1
    b2 = jax.random.normal(kb2, (C_OUT,), dtype=jnp.float32) * 0.01

    out = conv_block_forward(x, w1, b1, w2, b2)
    out = jax.block_until_ready(out)

    ref = _reference_forward(x, w1, b1, w2, b2)
    assert out.shape == (N, C_OUT, H, W), out.shape
    assert jnp.allclose(out, ref, rtol=1e-3, atol=1e-3), float(
        jnp.max(jnp.abs(out - ref)))

    print("KERNEL_OK")
</pallas_src>

<mosaic_0001>
module attributes {stable_mosaic.version = 11 : i64} {
  func.func @kernel(%arg0: i32, %arg1: memref<1x4x256xf32, #tpu.memory_space<vmem>>, %arg2: memref<8x36xf32, #tpu.memory_space<vmem>>, %arg3: memref<8x1xf32, #tpu.memory_space<vmem>>, %arg4: memref<8x72xf32, #tpu.memory_space<vmem>>, %arg5: memref<8x1xf32, #tpu.memory_space<vmem>>, %arg6: memref<9x256xf32, #tpu.memory_space<vmem>>, %arg7: memref<1x8x256xf32, #tpu.memory_space<vmem>>) attributes {dimension_semantics = [#tpu.dimension_semantics<parallel>], iteration_bounds = array<i64: 2>, scalar_prefetch = 0 : i64, scratch_operands = 0 : i64, tpu.core_type = #tpu.core_type<tc>, window_params = [{transform_indices = @transform_0, window_bounds = array<i64: 1, 4, 256>}, {pipeline_mode = #tpu.pipeline_mode<synchronous>, transform_indices = @transform_1, window_bounds = array<i64: 8, 36>}, {pipeline_mode = #tpu.pipeline_mode<synchronous>, transform_indices = @transform_2, window_bounds = array<i64: 8, 1>}, {pipeline_mode = #tpu.pipeline_mode<synchronous>, transform_indices = @transform_3, window_bounds = array<i64: 8, 72>}, {pipeline_mode = #tpu.pipeline_mode<synchronous>, transform_indices = @transform_4, window_bounds = array<i64: 8, 1>}, {pipeline_mode = #tpu.pipeline_mode<synchronous>, transform_indices = @transform_5, window_bounds = array<i64: 9, 256>}, {transform_indices = @transform_6, window_bounds = array<i64: 1, 8, 256>}]} {
    %c0 = arith.constant 0 : index
    %c0_0 = arith.constant 0 : index
    %0 = vector.load %arg6[%c0, %c0_0] : memref<9x256xf32, #tpu.memory_space<vmem>>, vector<9x256xf32>
    %c0_1 = arith.constant 0 : index
    %c0_2 = arith.constant 0 : index
    %c0_3 = arith.constant 0 : index
    %1 = vector.load %arg1[%c0_1, %c0_2, %c0_3] : memref<1x4x256xf32, #tpu.memory_space<vmem>>, vector<1x4x256xf32>
    %2 = vector.shape_cast %1 : vector<1x4x256xf32> to vector<4x256xf32>
    %c0_4 = arith.constant 0 : index
    %c0_5 = arith.constant 0 : index
    %3 = vector.load %arg2[%c0_4, %c0_5] : memref<8x36xf32, #tpu.memory_space<vmem>>, vector<8x36xf32>
    %c0_6 = arith.constant 0 : index
    %c0_7 = arith.constant 0 : index
    %4 = vector.load %arg3[%c0_6, %c0_7] : memref<8x1xf32, #tpu.memory_space<vmem>>, vector<8x1xf32>
    %c17_i32 = arith.constant 17 : i32
    %5 = tpu.dynamic_rotate %2 by %c17_i32 dim 1 : vector<4x256xf32>, i32 -> vector<4x256xf32>
    %6 = vector.extract_strided_slice %0 {offsets = [0, 0], sizes = [1, 256], strides = [1, 1]} : vector<9x256xf32> to vector<1x256xf32>
    %7 = vector.broadcast %6 : vector<1x256xf32> to vector<4x256xf32>
    %8 = arith.mulf %5, %7 : vector<4x256xf32>
    %c16_i32 = arith.constant 16 : i32
    %9 = tpu.dynamic_rotate %2 by %c16_i32 dim 1 : vector<4x256xf32>, i32 -> vector<4x256xf32>
    %10 = vector.extract_strided_slice %0 {offsets = [1, 0], sizes = [1, 256], strides = [1, 1]} : vector<9x256xf32> to vector<1x256xf32>
    %11 = vector.broadcast %10 : vector<1x256xf32> to vector<4x256xf32>
    %12 = arith.mulf %9, %11 : vector<4x256xf32>
    %c15_i32 = arith.constant 15 : i32
    %13 = tpu.dynamic_rotate %2 by %c15_i32 dim 1 : vector<4x256xf32>, i32 -> vector<4x256xf32>
    %14 = vector.extract_strided_slice %0 {offsets = [2, 0], sizes = [1, 256], strides = [1, 1]} : vector<9x256xf32> to vector<1x256xf32>
    %15 = vector.broadcast %14 : vector<1x256xf32> to vector<4x256xf32>
    %16 = arith.mulf %13, %15 : vector<4x256xf32>
    %c1_i32 = arith.constant 1 : i32
    %17 = tpu.dynamic_rotate %2 by %c1_i32 dim 1 : vector<4x256xf32>, i32 -> vector<4x256xf32>
    %18 = vector.extract_strided_slice %0 {offsets = [3, 0], sizes = [1, 256], strides = [1, 1]} : vector<9x256xf32> to vector<1x256xf32>
    %19 = vector.broadcast %18 : vector<1x256xf32> to vector<4x256xf32>
    %20 = arith.mulf %17, %19 : vector<4x256xf32>
    %c255_i32 = arith.constant 255 : i32
    %21 = tpu.dynamic_rotate %2 by %c255_i32 dim 1 : vector<4x256xf32>, i32 -> vector<4x256xf32>
    %22 = vector.extract_strided_slice %0 {offsets = [5, 0], sizes = [1, 256], strides = [1, 1]} : vector<9x256xf32> to vector<1x256xf32>
    %23 = vector.broadcast %22 : vector<1x256xf32> to vector<4x256xf32>
    %24 = arith.mulf %21, %23 : vector<4x256xf32>
    %c241_i32 = arith.constant 241 : i32
    %25 = tpu.dynamic_rotate %2 by %c241_i32 dim 1 : vector<4x256xf32>, i32 -> vector<4x256xf32>
    %26 = vector.extract_strided_slice %0 {offsets = [6, 0], sizes = [1, 256], strides = [1, 1]} : vector<9x256xf32> to vector<1x256xf32>
    %27 = vector.broadcast %26 : vector<1x256xf32> to vector<4x256xf32>
    %28 = arith.mulf %25, %27 : vector<4x256xf32>
    %c240_i32 = arith.constant 240 : i32
    %29 = tpu.dynamic_rotate %2 by %c240_i32 dim 1 : vector<4x256xf32>, i32 -> vector<4x256xf32>
    %30 = vector.extract_strided_slice %0 {offsets = [7, 0], sizes = [1, 256], strides = [1, 1]} : vector<9x256xf32> to vector<1x256xf32>
    %31 = vector.broadcast %30 : vector<1x256xf32> to vector<4x256xf32>
    %32 = arith.mulf %29, %31 : vector<4x256xf32>
    %c239_i32 = arith.constant 239 : i32
    %33 = tpu.dynamic_rotate %2 by %c239_i32 dim 1 : vector<4x256xf32>, i32 -> vector<4x256xf32>
    %34 = vector.extract_strided_slice %0 {offsets = [8, 0], sizes = [1, 256], strides = [1, 1]} : vector<9x256xf32> to vector<1x256xf32>
    %35 = vector.broadcast %34 : vector<1x256xf32> to vector<4x256xf32>
    %36 = arith.mulf %33, %35 : vector<4x256xf32>
    %37 = tpu.concatenate %8, %12, %16, %20, %2, %24, %28, %32, %36 in 0 : vector<4x256xf32>, vector<4x256xf32>, vector<4x256xf32>, vector<4x256xf32>, vector<4x256xf32>, vector<4x256xf32>, vector<4x256xf32>, vector<4x256xf32>, vector<4x256xf32> -> vector<36x256xf32>
    %cst = arith.constant dense<0.000000e+00> : vector<8x256xf32>
    %38 = tpu.matmul %3, %37, %cst {dimension_numbers = #tpu.dot_dimension_numbers<[1], [0], [0], [1], [0, 0, 1, 1], [], []>} : vector<8x36xf32>, vector<36x256xf32>, vector<8x256xf32> -> vector<8x256xf32>
    %39 = vector.broadcast %4 : vector<8x1xf32> to vector<8x256xf32>
    %40 = arith.addf %38, %39 : vector<8x256xf32>
    %cst_8 = arith.constant dense<0.000000e+00> : vector<8xf32>
    %41 = vector.multi_reduction <add>, %40, %cst_8 [1] : vector<8x256xf32> to vector<8xf32>
    %42 = vector.shape_cast %41 : vector<8xf32> to vector<8x1xf32>
    %43 = arith.mulf %40, %40 : vector<8x256xf32>
    %cst_9 = arith.constant dense<0.000000e+00> : vector<8xf32>
    %44 = vector.multi_reduction <add>, %43, %cst_9 [1] : vector<8x256xf32> to vector<8xf32>
    %45 = vector.shape_cast %44 : vector<8xf32> to vector<8x1xf32>
    %cst_10 = arith.constant 3.906250e-03 : f32
    %46 = vector.broadcast %cst_10 : f32 to vector<8x1xf32>
    %47 = arith.mulf %42, %46 : vector<8x1xf32>
    %cst_11 = arith.constant 3.906250e-03 : f32
    %48 = vector.broadcast %cst_11 : f32 to vector<8x1xf32>
    %49 = arith.mulf %45, %48 : vector<8x1xf32>
    %50 = arith.mulf %47, %47 : vector<8x1xf32>
    %51 = arith.subf %49, %50 : vector<8x1xf32>
    %cst_12 = arith.constant 0.000000e+00 : f32
    %52 = vector.broadcast %cst_12 : f32 to vector<8x1xf32>
    %53 = arith.maximumf %51, %52 : vector<8x1xf32>
    %54 = vector.broadcast %47 : vector<8x1xf32> to vector<8x256xf32>
    %55 = arith.subf %40, %54 : vector<8x256xf32>
    %cst_13 = arith.constant 9.99999974E-6 : f32
    %56 = vector.broadcast %cst_13 : f32 to vector<8x1xf32>
    %57 = arith.addf %53, %56 : vector<8x1xf32>
    %58 = math.rsqrt %57 : vector<8x1xf32>
    %59 = vector.broadcast %58 : vector<8x1xf32> to vector<8x256xf32>
    %60 = arith.mulf %55, %59 : vector<8x256xf32>
    %cst_14 = arith.constant 0.000000e+00 : f32
    %61 = vector.broadcast %cst_14 : f32 to vector<8x256xf32>
    %62 = arith.maximumf %60, %61 : vector<8x256xf32>
    %c0_15 = arith.constant 0 : index
    %c0_16 = arith.constant 0 : index
    %63 = vector.load %arg4[%c0_15, %c0_16] : memref<8x72xf32, #tpu.memory_space<vmem>>, vector<8x72xf32>
    %c0_17 = arith.constant 0 : index
    %c0_18 = arith.constant 0 : index
    %64 = vector.load %arg5[%c0_17, %c0_18] : memref<8x1xf32, #tpu.memory_space<vmem>>, vector<8x1xf32>
    %c17_i32_19 = arith.constant 17 : i32
    %65 = tpu.dynamic_rotate %62 by %c17_i32_19 dim 1 : vector<8x256xf32>, i32 -> vector<8x256xf32>
    %66 = vector.extract_strided_slice %0 {offsets = [0, 0], sizes = [1, 256], strides = [1, 1]} : vector<9x256xf32> to vector<1x256xf32>
    %67 = vector.broadcast %66 : vector<1x256xf32> to vector<8x256xf32>
    %68 = arith.mulf %65, %67 : vector<8x256xf32>
    %c16_i32_20 = arith.constant 16 : i32
    %69 = tpu.dynamic_rotate %62 by %c16_i32_20 dim 1 : vector<8x256xf32>, i32 -> vector<8x256xf32>
    %70 = vector.extract_strided_slice %0 {offsets = [1, 0], sizes = [1, 256], strides = [1, 1]} : vector<9x256xf32> to vector<1x256xf32>
    %71 = vector.broadcast %70 : vector<1x256xf32> to vector<8x256xf32>
    %72 = arith.mulf %69, %71 : vector<8x256xf32>
    %c15_i32_21 = arith.constant 15 : i32
    %73 = tpu.dynamic_rotate %62 by %c15_i32_21 dim 1 : vector<8x256xf32>, i32 -> vector<8x256xf32>
    %74 = vector.extract_strided_slice %0 {offsets = [2, 0], sizes = [1, 256], strides = [1, 1]} : vector<9x256xf32> to vector<1x256xf32>
    %75 = vector.broadcast %74 : vector<1x256xf32> to vector<8x256xf32>
    %76 = arith.mulf %73, %75 : vector<8x256xf32>
    %c1_i32_22 = arith.constant 1 : i32
    %77 = tpu.dynamic_rotate %62 by %c1_i32_22 dim 1 : vector<8x256xf32>, i32 -> vector<8x256xf32>
    %78 = vector.extract_strided_slice %0 {offsets = [3, 0], sizes = [1, 256], strides = [1, 1]} : vector<9x256xf32> to vector<1x256xf32>
    %79 = vector.broadcast %78 : vector<1x256xf32> to vector<8x256xf32>
    %80 = arith.mulf %77, %79 : vector<8x256xf32>
    %c255_i32_23 = arith.constant 255 : i32
    %81 = tpu.dynamic_rotate %62 by %c255_i32_23 dim 1 : vector<8x256xf32>, i32 -> vector<8x256xf32>
    %82 = vector.extract_strided_slice %0 {offsets = [5, 0], sizes = [1, 256], strides = [1, 1]} : vector<9x256xf32> to vector<1x256xf32>
    %83 = vector.broadcast %82 : vector<1x256xf32> to vector<8x256xf32>
    %84 = arith.mulf %81, %83 : vector<8x256xf32>
    %c241_i32_24 = arith.constant 241 : i32
    %85 = tpu.dynamic_rotate %62 by %c241_i32_24 dim 1 : vector<8x256xf32>, i32 -> vector<8x256xf32>
    %86 = vector.extract_strided_slice %0 {offsets = [6, 0], sizes = [1, 256], strides = [1, 1]} : vector<9x256xf32> to vector<1x256xf32>
    %87 = vector.broadcast %86 : vector<1x256xf32> to vector<8x256xf32>
    %88 = arith.mulf %85, %87 : vector<8x256xf32>
    %c240_i32_25 = arith.constant 240 : i32
    %89 = tpu.dynamic_rotate %62 by %c240_i32_25 dim 1 : vector<8x256xf32>, i32 -> vector<8x256xf32>
    %90 = vector.extract_strided_slice %0 {offsets = [7, 0], sizes = [1, 256], strides = [1, 1]} : vector<9x256xf32> to vector<1x256xf32>
    %91 = vector.broadcast %90 : vector<1x256xf32> to vector<8x256xf32>
    %92 = arith.mulf %89, %91 : vector<8x256xf32>
    %c239_i32_26 = arith.constant 239 : i32
    %93 = tpu.dynamic_rotate %62 by %c239_i32_26 dim 1 : vector<8x256xf32>, i32 -> vector<8x256xf32>
    %94 = vector.extract_strided_slice %0 {offsets = [8, 0], sizes = [1, 256], strides = [1, 1]} : vector<9x256xf32> to vector<1x256xf32>
    %95 = vector.broadcast %94 : vector<1x256xf32> to vector<8x256xf32>
    %96 = arith.mulf %93, %95 : vector<8x256xf32>
    %97 = tpu.concatenate %68, %72, %76, %80, %62, %84, %88, %92, %96 in 0 : vector<8x256xf32>, vector<8x256xf32>, vector<8x256xf32>, vector<8x256xf32>, vector<8x256xf32>, vector<8x256xf32>, vector<8x256xf32>, vector<8x256xf32>, vector<8x256xf32> -> vector<72x256xf32>
    %cst_27 = arith.constant dense<0.000000e+00> : vector<8x256xf32>
    %98 = tpu.matmul %63, %97, %cst_27 {dimension_numbers = #tpu.dot_dimension_numbers<[1], [0], [0], [1], [0, 0, 1, 1], [], []>} : vector<8x72xf32>, vector<72x256xf32>, vector<8x256xf32> -> vector<8x256xf32>
    %99 = vector.broadcast %64 : vector<8x1xf32> to vector<8x256xf32>
    %100 = arith.addf %98, %99 : vector<8x256xf32>
    %cst_28 = arith.constant dense<0.000000e+00> : vector<8xf32>
    %101 = vector.multi_reduction <add>, %100, %cst_28 [1] : vector<8x256xf32> to vector<8xf32>
    %102 = vector.shape_cast %101 : vector<8xf32> to vector<8x1xf32>
    %103 = arith.mulf %100, %100 : vector<8x256xf32>
    %cst_29 = arith.constant dense<0.000000e+00> : vector<8xf32>
    %104 = vector.multi_reduction <add>, %103, %cst_29 [1] : vector<8x256xf32> to vector<8xf32>
    %105 = vector.shape_cast %104 : vector<8xf32> to vector<8x1xf32>
    %cst_30 = arith.constant 3.906250e-03 : f32
    %106 = vector.broadcast %cst_30 : f32 to vector<8x1xf32>
    %107 = arith.mulf %102, %106 : vector<8x1xf32>
    %cst_31 = arith.constant 3.906250e-03 : f32
    %108 = vector.broadcast %cst_31 : f32 to vector<8x1xf32>
    %109 = arith.mulf %105, %108 : vector<8x1xf32>
    %110 = arith.mulf %107, %107 : vector<8x1xf32>
    %111 = arith.subf %109, %110 : vector<8x1xf32>
    %cst_32 = arith.constant 0.000000e+00 : f32
    %112 = vector.broadcast %cst_32 : f32 to vector<8x1xf32>
    %113 = arith.maximumf %111, %112 : vector<8x1xf32>
    %114 = vector.broadcast %107 : vector<8x1xf32> to vector<8x256xf32>
    %115 = arith.subf %100, %114 : vector<8x256xf32>
    %cst_33 = arith.constant 9.99999974E-6 : f32
    %116 = vector.broadcast %cst_33 : f32 to vector<8x1xf32>
    %117 = arith.addf %113, %116 : vector<8x1xf32>
    %118 = math.rsqrt %117 : vector<8x1xf32>
    %119 = vector.broadcast %118 : vector<8x1xf32> to vector<8x256xf32>
    %120 = arith.mulf %115, %119 : vector<8x256xf32>
    %cst_34 = arith.constant 0.000000e+00 : f32
    %121 = vector.broadcast %cst_34 : f32 to vector<8x256xf32>
    %122 = arith.maximumf %120, %121 : vector<8x256xf32>
    %c0_35 = arith.constant 0 : index
    %c0_36 = arith.constant 0 : index
    %c0_37 = arith.constant 0 : index
    %123 = vector.load %arg7[%c0_35, %c0_36, %c0_37] : memref<1x8x256xf32, #tpu.memory_space<vmem>>, vector<1x8x256xf32>
    %124 = vector.shape_cast %123 : vector<1x8x256xf32> to vector<8x256xf32>
    %125 = vector.shape_cast %122 : vector<8x256xf32> to vector<1x8x256xf32>
    tpu.vector_store %arg7[%c0_35, %c0_36, %c0_37], %125 {strides = array<i32>} : memref<1x8x256xf32, #tpu.memory_space<vmem>>, vector<1x8x256xf32>,
    return
  }
  func.func @transform_0(%arg0: i32) -> (i32, i32, i32) {
    %c0_i32 = arith.constant 0 : i32
    %c0_i32_0 = arith.constant 0 : i32
    %c0_i32_1 = arith.constant 0 : i32
    return %arg0, %c0_i32, %c0_i32_0 : i32, i32, i32
  }
  func.func @transform_1(%arg0: i32) -> (i32, i32) {
    %c0_i32 = arith.constant 0 : i32
    %c0_i32_0 = arith.constant 0 : i32
    %c0_i32_1 = arith.constant 0 : i32
    return %c0_i32, %c0_i32_0 : i32, i32
  }
  func.func @transform_2(%arg0: i32) -> (i32, i32) {
    %c0_i32 = arith.constant 0 : i32
    %c0_i32_0 = arith.constant 0 : i32
    %c0_i32_1 = arith.constant 0 : i32
    return %c0_i32, %c0_i32_0 : i32, i32
  }
  func.func @transform_3(%arg0: i32) -> (i32, i32) {
    %c0_i32 = arith.constant 0 : i32
    %c0_i32_0 = arith.constant 0 : i32
    %c0_i32_1 = arith.constant 0 : i32
    return %c0_i32, %c0_i32_0 : i32, i32
  }
  func.func @transform_4(%arg0: i32) -> (i32, i32) {
    %c0_i32 = arith.constant 0 : i32
    %c0_i32_0 = arith.constant 0 : i32
    %c0_i32_1 = arith.constant 0 : i32
    return %c0_i32, %c0_i32_0 : i32, i32
  }
  func.func @transform_5(%arg0: i32) -> (i32, i32) {
    %c0_i32 = arith.constant 0 : i32
    %c0_i32_0 = arith.constant 0 : i32
    %c0_i32_1 = arith.constant 0 : i32
    return %c0_i32, %c0_i32_0 : i32, i32
  }
  func.func @transform_6(%arg0: i32) -> (i32, i32, i32) {
    %c0_i32 = arith.constant 0 : i32
    %c0_i32_0 = arith.constant 0 : i32
    %c0_i32_1 = arith.constant 0 : i32
    return %arg0, %c0_i32, %c0_i32_0 : i32, i32, i32
  }
}

</mosaic_0001>

<llo_original>
// kernel: conv_block_forward.1
$region0: #{conv_block_forward.1}
  #allocation0 [shape = 'u32[]', space=smem, size = 0x4, offset = 0x4, fixed_abs, tag = 'smem constant byte address 0x4 - core index']
  #allocation1 [shape = 'u32[72,128]{1,0:T(1,128)}', space=vmem, size = 0x9000, scoped, tag = 'internal scratch']
  %s0 = inlined_call_operand.vmem [shape: f32[2,4,256], index: 0, kind: input, shape index: {}]
  %s1 = inlined_call_operand.vmem [shape: f32[8,36], index: 1, kind: input, shape index: {}]
  %s2 = inlined_call_operand.vmem [shape: f32[8,1], index: 2, kind: input, shape index: {}]
  %s3 = inlined_call_operand.vmem [shape: f32[8,72], index: 3, kind: input, shape index: {}]
  %s4 = inlined_call_operand.vmem [shape: f32[8,1], index: 4, kind: input, shape index: {}]
  %s5 = inlined_call_operand.vmem [shape: f32[9,256], index: 5, kind: input, shape index: {}]
  %s6 = inlined_call_operand.vmem [shape: f32[2,8,256], index: 6, kind: output, shape index: {}]
  %s7 = sld [smem:[#allocation0]]
  $region57: #{conv_block_forward.1} parent=0
    _
  %s9 = ssub.s32 1, %s7
  %s10 = scalar_select 0, %s9, %s7
  loop: start=0, step=1, limit=4
  $region2: #{conv_block_forward.1} parent=0 // loop_pre_header
    _
  $region3: #{conv_block_forward.1} parent=0 // loop_header
    %s12 = sphi 0, %s16
    %p13 = scmp.ge.s32.totalorder %s12, 4
    %s22 = sphi 0, %s24
    %s25 = sphi 0, %s22
    %s26 = sphi 0, %s25
    %s42 = sphi 0, %s26
    %s46 = sphi 0, %s46
    %s48 = sphi 0, %s46
    %s49 = sphi 0, %s48
    %s63 = sphi 0, %s49
    %s67 = sphi 0, %s67
    %s69 = sphi 0, %s67
    %s70 = sphi 0, %s69
    %s84 = sphi 0, %s70
    %s88 = sphi 0, %s88
    %s90 = sphi 0, %s88
    %s91 = sphi 0, %s90
    %s105 = sphi 0, %s91
    %s109 = sphi 0, %s109
    %s111 = sphi 0, %s109
    %s112 = sphi 0, %s111
    %s126 = sphi 0, %s112
    %s130 = sphi 0, %s130
    %s132 = sphi 0, %s130
    %s133 = sphi 0, %s132
    %s147 = sphi 0, %s133
    %s153 = sphi 0, %s155
    %s156 = sphi 0, %s153
    %s157 = sphi 0, %s156
    %s173 = sphi 0, %s157
  $region4: #{conv_block_forward.1} parent=0 // loop_header_branch
    %15 = sbr.rel (%p13) target = $region8
  $region5: #{conv_block_forward.1} parent=0 // loop_body
    %s17 = ssub.s32 %s12, 1
    %s18 = ssub.s32 %s12, 2
    %s19 = sadd.s32 %s12, 1
    %s20 = ssub.s32 %s12, %s19
    %p21 = scmp.eq.s32.totalorder %s20, 0
    %s23 = sadd.s32 %s22, 1
    %s24 = scalar_select %p21, %s22, %s23
    %p27 = pneg %p21
    %p28 = scmp.eq.s32.totalorder %s12, 1
    %p29 = por %p27, %p28
    %p30 = scmp.ne.s32.totalorder %s22, %s25
    %p31 = scmp.eq.s32.totalorder %s12, 0
    %p32 = por %p30, %p31
    %p33 = scmp.ne.s32.totalorder %s22, %s25
    %p34 = scmp.eq.s32.totalorder %s17, 1
    %p35 = por %p33, %p34
    %p36 = scmp.ne.s32.totalorder %s25, %s26
    %p37 = scmp.eq.s32.totalorder %s17, 0
    %p38 = por %p36, %p37
    %p39 = scmp.ne.s32.totalorder %s25, %s26
    %p40 = scmp.eq.s32.totalorder %s18, 1
    %p41 = por %p39, %p40
    %p43 = scmp.ne.s32.totalorder %s26, %s42
    %p44 = scmp.eq.s32.totalorder %s18, 0
    %p45 = por %p43, %p44
    %s47 = sadd.s32 %s46, 1
    %p50 = scmp.eq.s32.totalorder %s12, 1
    %p51 = scmp.ne.s32.totalorder %s46, %s48
    %p52 = scmp.eq.s32.totalorder %s12, 0
    %p53 = por %p51, %p52
    %p54 = scmp.ne.s32.totalorder %s46, %s48
    %p55 = scmp.eq.s32.totalorder %s17, 1
    %p56 = por %p54, %p55
    %p57 = scmp.ne.s32.totalorder %s48, %s49
    %p58 = scmp.eq.s32.totalorder %s17, 0
    %p59 = por %p57, %p58
    %p60 = scmp.ne.s32.totalorder %s48, %s49
    %p61 = scmp.eq.s32.totalorder %s18, 1
    %p62 = por %p60, %p61
    %p64 = scmp.ne.s32.totalorder %s49, %s63
    %p65 = scmp.eq.s32.totalorder %s18, 0
    %p66 = por %p64, %p65
    %s68 = sadd.s32 %s67, 1
    %p71 = scmp.eq.s32.totalorder %s12, 1
    %p72 = scmp.ne.s32.totalorder %s67, %s69
    %p73 = scmp.eq.s32.totalorder %s12, 0
    %p74 = por %p72, %p73
    %p75 = scmp.ne.s32.totalorder %s67, %s69
    %p76 = scmp.eq.s32.totalorder %s17, 1
    %p77 = por %p75, %p76
    %p78 = scmp.ne.s32.totalorder %s69, %s70
    %p79 = scmp.eq.s32.totalorder %s17, 0
    %p80 = por %p78, %p79
    %p81 = scmp.ne.s32.totalorder %s69, %s70
    %p82 = scmp.eq.s32.totalorder %s18, 1
    %p83 = por %p81, %p82
    %p85 = scmp.ne.s32.totalorder %s70, %s84
    %p86 = scmp.eq.s32.totalorder %s18, 0
    %p87 = por %p85, %p86
    %s89 = sadd.s32 %s88, 1
    %p92 = scmp.eq.s32.totalorder %s12, 1
    %p93 = scmp.ne.s32.totalorder %s88, %s90
    %p94 = scmp.eq.s32.totalorder %s12, 0
    %p95 = por %p93, %p94
    %p96 = scmp.ne.s32.totalorder %s88, %s90
    %p97 = scmp.eq.s32.totalorder %s17, 1
    %p98 = por %p96, %p97
    %p99 = scmp.ne.s32.totalorder %s90, %s91
    %p100 = scmp.eq.s32.totalorder %s17, 0
    %p101 = por %p99, %p100
    %p102 = scmp.ne.s32.totalorder %s90, %s91
    %p103 = scmp.eq.s32.totalorder %s18, 1
    %p104 = por %p102, %p103
    %p106 = scmp.ne.s32.totalorder %s91, %s105
    %p107 = scmp.eq.s32.totalorder %s18, 0
    %p108 = por %p106, %p107
    %s110 = sadd.s32 %s109, 1
    %p113 = scmp.eq.s32.totalorder %s12, 1
    %p114 = scmp.ne.s32.totalorder %s109, %s111
    %p115 = scmp.eq.s32.totalorder %s12, 0
    %p116 = por %p114, %p115
    %p117 = scmp.ne.s32.totalorder %s109, %s111
    %p118 = scmp.eq.s32.totalorder %s17, 1
    %p119 = por %p117, %p118
    %p120 = scmp.ne.s32.totalorder %s111, %s112
    %p121 = scmp.eq.s32.totalorder %s17, 0
    %p122 = por %p120, %p121
    %p123 = scmp.ne.s32.totalorder %s111, %s112
    %p124 = scmp.eq.s32.totalorder %s18, 1
    %p125 = por %p123, %p124
    %p127 = scmp.ne.s32.totalorder %s112, %s126
    %p128 = scmp.eq.s32.totalorder %s18, 0
    %p129 = por %p127, %p128
    %s131 = sadd.s32 %s130, 1
    %p134 = scmp.eq.s32.totalorder %s12, 1
    %p135 = scmp.ne.s32.totalorder %s130, %s132
    %p136 = scmp.eq.s32.totalorder %s12, 0
    %p137 = por %p135, %p136
    %p138 = scmp.ne.s32.totalorder %s130, %s132
    %p139 = scmp.eq.s32.totalorder %s17, 1
    %p140 = por %p138, %p139
    %p141 = scmp.ne.s32.totalorder %s132, %s133
    %p142 = scmp.eq.s32.totalorder %s17, 0
    %p143 = por %p141, %p142
    %p144 = scmp.ne.s32.totalorder %s132, %s133
    %p145 = scmp.eq.s32.totalorder %s18, 1
    %p146 = por %p144, %p145
    %p148 = scmp.ne.s32.totalorder %s133, %s147
    %p149 = scmp.eq.s32.totalorder %s18, 0
    %p150 = por %p148, %p149
    %s151 = ssub.s32 %s12, %s19
    %p152 = scmp.eq.s32.totalorder %s151, 0
    %s154 = sadd.s32 %s153, 1
    %s155 = scalar_select %p152, %s153, %s154
    %p158 = pneg %p152
    %p159 = scmp.eq.s32.totalorder %s12, 1
    %p160 = por %p158, %p159
    %p161 = scmp.ne.s32.totalorder %s153, %s156
    %p162 = scmp.eq.s32.totalorder %s12, 0
    %p163 = por %p161, %p162
    %p164 = scmp.ne.s32.totalorder %s153, %s156
    %p165 = scmp.eq.s32.totalorder %s17, 1
    %p166 = por %p164, %p165
    %p167 = scmp.ne.s32.totalorder %s156, %s157
    %p168 = scmp.eq.s32.totalorder %s17, 0
    %p169 = por %p167, %p168
    %p170 = scmp.ne.s32.totalorder %s156, %s157
    %p171 = scmp.eq.s32.totalorder %s18, 1
    %p172 = por %p170, %p171
    %p174 = scmp.ne.s32.totalorder %s157, %s173
    %p175 = scmp.eq.s32.totalorder %s18, 0
    %p176 = por %p174, %p175
    %p177 = scmp.le.s32.totalorder 1, %s12
    %p178 = scmp.lt.s32.totalorder %s12, 3
    %p179 = pnand %p177, %p178
    %p180 = pneg %p179
    // Predicated region
    $region9: #{conv_block_forward.1} parent=5 // pred_check
      _
    $region10: #{conv_block_forward.1} parent=5 // pred_check_branch
      %182 = sbr.rel (%p179) target = $region12
    $region11: #{conv_block_forward.1} parent=5 // pred_region
      %s183 = ssub.s32 %s12, 1
      // Predicated region
      $region13: #{conv_block_forward.1} parent=11 // pred_check
        %p184 = pneg %p59
      $region14: #{conv_block_forward.1} parent=11 // pred_check_branch
        %186 = sbr.rel (%p184) target = $region16
      $region15: #{conv_block_forward.1} parent=11 // pred_region
        _
      $region16: #{conv_block_forward.1} parent=11 // pred_fallthru
        _
      // Predicated region
      $region17: #{conv_block_forward.1} parent=11 // pred_check
        %p187 = pneg %p80
      $region18: #{conv_block_forward.1} parent=11 // pred_check_branch
        %189 = sbr.rel (%p187) target = $region20
      $region19: #{conv_block_forward.1} parent=11 // pred_region
        _
      $region20: #{conv_block_forward.1} parent=11 // pred_fallthru
        _
      // Predicated region
      $region21: #{conv_block_forward.1} parent=11 // pred_check
        %p190 = pneg %p101
      $region22: #{conv_block_forward.1} parent=11 // pred_check_branch
        %192 = sbr.rel (%p190) target = $region24
      $region23: #{conv_block_forward.1} parent=11 // pred_region
        _
      $region24: #{conv_block_forward.1} parent=11 // pred_fallthru
        _
      // Predicated region
      $region25: #{conv_block_forward.1} parent=11 // pred_check
        %p193 = pneg %p122
      $region26: #{conv_block_forward.1} parent=11 // pred_check_branch
        %195 = sbr.rel (%p193) target = $region28
      $region27: #{conv_block_forward.1} parent=11 // pred_region
        _
      $region28: #{conv_block_forward.1} parent=11 // pred_fallthru
        _
      // Predicated region
      $region29: #{conv_block_forward.1} parent=11 // pred_check
        %p196 = pneg %p143
      $region30: #{conv_block_forward.1} parent=11 // pred_check_branch
        %198 = sbr.rel (%p196) target = $region32
      $region31: #{conv_block_forward.1} parent=11 // pred_region
        _
      $region32: #{conv_block_forward.1} parent=11 // pred_fallthru
        _
    $region12: #{conv_block_forward.1} parent=5 // pred_fallthru
      _
    %p199 = scmp.lt.s32.totalorder %s12, 2
    // Predicated region
    $region33: #{conv_block_forward.1} parent=5 // pred_check
      %p200 = pneg %p199
    $region34: #{conv_block_forward.1} parent=5 // pred_check_branch
      %202 = sbr.rel (%p200) target = $region36
    $region35: #{conv_block_forward.1} parent=5 // pred_region
      // Predicated region
      $region37: #{conv_block_forward.1} parent=35 // pred_check
        %p203 = pneg %p32
      $region38: #{conv_block_forward.1} parent=35 // pred_check_branch
        %205 = sbr.rel (%p203) target = $region40
      $region39: #{conv_block_forward.1} parent=35 // pred_region
        %p206 = scmp.lt.s32.totalorder %s12, 1
        %s207 = scalar_select %p206, %s12, 1
        %s208 = smul.addr %s207, 2
        %s209 = smul.addr %s208, 4
        %s210 = scalar_lea.vmem %s0, %s209
      $region40: #{conv_block_forward.1} parent=35 // pred_fallthru
        _
    $region36: #{conv_block_forward.1} parent=5 // pred_fallthru
      _
    %p211 = scmp.le.s32.totalorder 1, %s12
    %p212 = scmp.lt.s32.totalorder %s12, 3
    %p213 = pnand %p211, %p212
    %p214 = pneg %p213
    // Predicated region
    $region41: #{conv_block_forward.1} parent=5 // pred_check
      _
    $region42: #{conv_block_forward.1} parent=5 // pred_check_branch
      %216 = sbr.rel (%p213) target = $region44
    $region43: #{conv_block_forward.1} parent=5 // pred_region
      %s217 = ssub.s32 %s12, 1
      %p218 = scmp.lt.s32.totalorder %s17, 1
      %s219 = scalar_select %p218, %s17, 1
      %s220 = smul.addr %s219, 2
      %s221 = smul.addr %s220, 4
      %s222 = scalar_lea.vmem %s0, %s221
      %p223 = pneg %p38
      %p224 = pneg %p35
      %p225 = pneg %p59
      %p226 = pneg %p56
      %p227 = pneg %p80
      %p228 = pneg %p77
      %p229 = pneg %p101
      %p230 = pneg %p98
      %p231 = pneg %p122
      %p232 = pneg %p119
      %p233 = pneg %p143
      %p234 = pneg %p140
      %p235 = pneg %p169
      %p236 = pneg %p166
      %p237 = scmp.lt.s32.totalorder %s17, 1
      %s238 = scalar_select %p237, %s17, 1
      %s239 = smul.addr %s238, 2
      %s240 = smul.addr %s239, 8
      %s241 = scalar_lea.vmem %s6, %s240
      %p242 = scmp.lt.s32.totalorder %s17, 1
      %s243 = scalar_select %p242, %s17, 1
      %s244 = smul.addr %s243, 2
      %s245 = smul.addr %s244, 4
      %s246 = scalar_lea.vmem %s0, %s245
      %p247 = scmp.lt.s32.totalorder %s17, 1
      %s248 = scalar_select %p247, %s17, 1
      %s249 = smul.addr %s248, 2
      %s250 = smul.addr %s249, 8
      %s251 = scalar_lea.vmem %s6, %s250
      %v252 = vld [vmem:[%s5] sm:$0xff]
      %v253 = vld [vmem:[%s5 + $0x8] sm:$0xff]
      %v254 = vld [vmem:[%s5 + $0x10] sm:$0x1]
      %v255 = vld [vmem:[%s5 + $0x18] sm:$0x1]
      %v256 = vld [vmem:[%s246] sm:$0xff]
      %v257 = vld [vmem:[%s1] sm:$0xff]
      %v258 = vld [vmem:[%s2] sm:$0xff]
      %260 = vst [vmem:[#allocation1] ss:$2 sm:$0xff] %v256
      %v261 = vld.sshfl [vmem:[#allocation1] sm:$0xff pattern:$0x75316420]
      %v262 = vld.sshfl [vmem:[#allocation1 + $0x8] sm:$0xff pattern:$0x75316420]
      %265 = vrot.lane.b32.xlu0 %v261, 17
      %v266 = vpop.permute.xlu0 %265
      %267 = vrot.lane.b32.xlu0 %v262, 17
      %v268 = vpop.permute.xlu0 %267
      %v269 = vlaneseq
      %v270 = vand.u32 %v269, 127
      %vm271 = vcmp.lt.s32.totalorder %v270, 17
      %v272 = vsel %vm271, %v266, %v268
      %v273 = vsel %vm271, %v268, %v266
      %v274 = vperm.slane %v252, 0
      %v275 = vperm.slane %v253, 0
      %v276 = vmul.f32 %v273, %v274
      %v277 = vmul.f32 %v272, %v275
      %278 = vst [vmem:[#allocation1] ss:$2 sm:$0xff] %v256
      %v279 = vld.sshfl [vmem:[#allocation1] sm:$0xff pattern:$0x75316420]
      %v280 = vld.sshfl [vmem:[#allocation1 + $0x8] sm:$0xff pattern:$0x75316420]
      %283 = vrot.lane.b32.xlu0 %v279, 16
      %v284 = vpop.permute.xlu0 %283
      %285 = vrot.lane.b32.xlu0 %v280, 16
      %v286 = vpop.permute.xlu0 %285
      %vm287 = vcmp.lt.s32.totalorder %v270, 16
      %v288 = vsel %vm287, %v284, %v286
      %v289 = vsel %vm287, %v286, %v284
      %v290 = vperm.slane %v252, 1
      %v291 = vperm.slane %v253, 1
      %v292 = vmul.f32 %v289, %v290
      %v293 = vmul.f32 %v288, %v291
      %294 = vst [vmem:[#allocation1] ss:$2 sm:$0xff] %v256
      %v295 = vld.sshfl [vmem:[#allocation1] sm:$0xff pattern:$0x75316420]
      %v296 = vld.sshfl [vmem:[#allocation1 + $0x8] sm:$0xff pattern:$0x75316420]
      %299 = vrot.lane.b32.xlu0 %v295, 15
      %v300 = vpop.permute.xlu0 %299
      %301 = vrot.lane.b32.xlu0 %v296, 15
      %v302 = vpop.permute.xlu0 %301
      %vm303 = vcmp.lt.s32.totalorder %v270, 15
      %v304 = vsel %vm303, %v300, %v302
      %v305 = vsel %vm303, %v302, %v300
      %v306 = vperm.slane %v252, 2
      %v307 = vperm.slane %v253, 2
      %v308 = vmul.f32 %v305, %v306
      %v309 = vmul.f32 %v304, %v307
      %310 = vst [vmem:[#allocation1] ss:$2 sm:$0xff] %v256
      %v311 = vld.sshfl [vmem:[#allocation1] sm:$0xff pattern:$0x75316420]
      %v312 = vld.sshfl [vmem:[#allocation1 + $0x8] sm:$0xff pattern:$0x75316420]
      %315 = vrot.lane.b32.xlu0 %v311, 1
      %v316 = vpop.permute.xlu0 %315
      %317 = vrot.lane.b32.xlu0 %v312, 1
      %v318 = vpop.permute.xlu0 %317
      %vm319 = vcmp.lt.s32.totalorder %v270, 1
      %v320 = vsel %vm319, %v316, %v318
      %v321 = vsel %vm319, %v318, %v316
      %v322 = vperm.slane %v252, 3
      %v323 = vperm.slane %v253, 3
      %v324 = vmul.f32 %v321, %v322
      %v325 = vmul.f32 %v320, %v323
      %326 = vst [vmem:[#allocation1] ss:$2 sm:$0xff] %v256
      %v327 = vld.sshfl [vmem:[#allocation1] sm:$0xff pattern:$0x75316420]
      %v328 = vld.sshfl [vmem:[#allocation1 + $0x8] sm:$0xff pattern:$0x75316420]
      %331 = vrot.lane.b32.xlu0 %v327, 127
      %v332 = vpop.permute.xlu0 %331
      %333 = vrot.lane.b32.xlu0 %v328, 127
      %v334 = vpop.permute.xlu0 %333
      %vm335 = vcmp.lt.s32.totalorder %v270, 127
      %v336 = vsel %vm335, %v332, %v334
      %v337 = vsel %vm335, %v334, %v332
      %v338 = vperm.slane %v252, 5
      %v339 = vperm.slane %v253, 5
      %v340 = vmul.f32 %v336, %v338
      %v341 = vmul.f32 %v337, %v339
      %342 = vst [vmem:[#allocation1] ss:$2 sm:$0xff] %v256
      %v343 = vld.sshfl [vmem:[#allocation1] sm:$0xff pattern:$0x75316420]
      %v344 = vld.sshfl [vmem:[#allocation1 + $0x8] sm:$0xff pattern:$0x75316420]
      %347 = vrot.lane.b32.xlu0 %v343, 113
      %v348 = vpop.permute.xlu0 %347
      %349 = vrot.lane.b32.xlu0 %v344, 113
      %v350 = vpop.permute.xlu0 %349
      %vm351 = vcmp.lt.s32.totalorder %v270, 113
      %v352 = vsel %vm351, %v348, %v350
      %v353 = vsel %vm351, %v350, %v348
      %v354 = vperm.slane %v252, 6
      %v355 = vperm.slane %v253, 6
      %v356 = vmul.f32 %v352, %v354
      %v357 = vmul.f32 %v353, %v355
      %358 = vst [vmem:[#allocation1] ss:$2 sm:$0xff] %v256
      %v359 = vld.sshfl [vmem:[#allocation1] sm:$0xff pattern:$0x75316420]
      %v360 = vld.sshfl [vmem:[#allocation1 + $0x8] sm:$0xff pattern:$0x75316420]
      %363 = vrot.lane.b32.xlu0 %v359, 112
      %v364 = vpop.permute.xlu0 %363
      %365 = vrot.lane.b32.xlu0 %v360, 112
      %v366 = vpop.permute.xlu0 %365
      %vm367 = vcmp.lt.s32.totalorder %v270, 112
      %v368 = vsel %vm367, %v364, %v366
      %v369 = vsel %vm367, %v366, %v364
      %v370 = vperm.slane %v252, 7
      %v371 = vperm.slane %v253, 7
      %v372 = vmul.f32 %v368, %v370
      %v373 = vmul.f32 %v369, %v371
      %374 = vst [vmem:[#allocation1] ss:$2 sm:$0xff] %v256
      %v375 = vld.sshfl [vmem:[#allocation1] sm:$0xff pattern:$0x75316420]
      %v376 = vld.sshfl [vmem:[#allocation1 + $0x8] sm:$0xff pattern:$0x75316420]
      %379 = vrot.lane.b32.xlu0 %v375, 111
      %v380 = vpop.permute.xlu0 %379
      %381 = vrot.lane.b32.xlu0 %v376, 111
      %v382 = vpop.permute.xlu0 %381
      %vm383 = vcmp.lt.s32.totalorder %v270, 111
      %v384 = vsel %vm383, %v380, %v382
      %v385 = vsel %vm383, %v382, %v380
      %v386 = vperm.slane %v254, 0
      %v387 = vperm.slane %v255, 0
      %v388 = vmul.f32 %v384, %v386
      %v389 = vmul.f32 %v385, %v387
      %v392 = vrot.slane %v292, 4
      %v393 = vrot.slane %v293, 4
      %v398 = vrot.slane %v324, 4
      %v399 = vrot.slane %v325, 4
      %402 = vst [vmem:[#allocation1] ss:$2 sm:$0xff] %v256
      %v403 = vld.sshfl [vmem:[#allocation1] sm:$0xff pattern:$0x75316420]
      %v404 = vld.sshfl [vmem:[#allocation1 + $0x8] sm:$0xff pattern:$0x75316420]
      %v409 = vrot.slane %v340, 4
      %v410 = vrot.slane %v341, 4
      %v415 = vrot.slane %v372, 4
      %v416 = vrot.slane %v373, 4
      %vm419 = vcmask 1043456
      %v420 = vsel %vm419, %v276, %v392
      %v421 = vsel %vm419, %v277, %v393
      %v422 = vsel %vm419, %v308, %v398
      %v423 = vsel %vm419, %v309, %v399
      %v424 = vsel %vm419, %v403, %v409
      %v425 = vsel %vm419, %v404, %v410
      %v426 = vsel %vm419, %v356, %v415
      %v427 = vsel %vm419, %v357, %v416
      %429 = vset.pattern.permute.xlu0 0
      %430 = vperm.xlu0 %429, %v258
      %v431 = vpop.permute.xlu0 %430
      %vm433 = vcmask 293888
      %v435 = vsel %vm433, %v257, 0
      %v438 = vsel %vm419, %v388, 0
      %v441 = vsel %vm419, %v389, 0
      %443 = vmatpush.msra.mxu0 0.0
      %444 = vmatpush.msra.mxu0 0.0
      %445 = vmatpush.msra.mxu0 0.0
      %446 = vmatpush.msra.mxu0 0.0
      %447 = vmatpush.msra.mxu0 0.0
      %448 = vmatpush.msra.mxu0 0.0
      %449 = vmatpush.msra.mxu0 0.0
      %450 = vmatpush.msra.mxu0 0.0
      %451 = vmatpush.msra.mxu0 0.0
      %452 = vmatpush.msra.mxu0 0.0
      %453 = vmatpush.msra.mxu0 0.0
      %454 = vmatpush.msra.mxu0 %v438
      %455 = vmatpush.msra.mxu0 %v426
      %456 = vmatpush.msra.mxu0 %v424
      %457 = vmatpush.msra.mxu0 %v422
      %458 = vmatpush.msra.mxu0 %v420
      %459 = vmatmul.f32.gmra.mxu0 %v435
      %v460 = vpop.f32.mrf.mxu0
      %v461 = vadd.f32 %v431, %v460
      %462 = vdwg.mxu0
      %463 = vmatpush.msra.mxu0 0.0
      %464 = vmatpush.msra.mxu0 0.0
      %465 = vmatpush.msra.mxu0 0.0
      %466 = vmatpush.msra.mxu0 0.0
      %467 = vmatpush.msra.mxu0 0.0
      %468 = vmatpush.msra.mxu0 0.0
      %469 = vmatpush.msra.mxu0 0.0
      %470 = vmatpush.msra.mxu0 0.0
      %471 = vmatpush.msra.mxu0 0.0
      %472 = vmatpush.msra.mxu0 0.0
      %473 = vmatpush.msra.mxu0 0.0
      %474 = vmatpush.msra.mxu0 %v441
      %475 = vmatpush.msra.mxu0 %v427
      %476 = vmatpush.msra.mxu0 %v425
      %477 = vmatpush.msra.mxu0 %v423
      %478 = vmatpush.msra.mxu0 %v421
      %479 = vmatmul.f32.gmra.mxu0 %v435
      %v480 = vpop.f32.mrf.mxu0
      %v481 = vadd.f32 %v431, %v480
      %482 = vdwg.mxu0
      %v483 = vadd.f32 %v461, %v481
      %484 = vadd.xlane.f32.xlu0 %v483
      %v485 = vpop.xlane.xlu0 %484
      %v486 = vmul.f32 %v461, %v461
      %v487 = vmul.f32 %v481, %v481
      %v488 = vadd.f32 %v486, %v487
      %489 = vadd.xlane.f32.xlu0 %v488
      %v490 = vpop.xlane.xlu0 %489
      %v491 = vmul.f32 %v485, 0.00390625
      %v492 = vmul.f32 %v490, 0.00390625
      %v493 = vmul.f32 %v491, %v491
      %v494 = vsub.f32 %v492, %v493
      %v495 = vmax.f32 %v494, 0.0
      %v496 = vsub.f32 %v461, %v491
      %v497 = vsub.f32 %v481, %v491
      %v498 = vadd.f32 %v495, 1e-05
      %v499 = vrsqrt.pop %v498
      %v500 = vmul.f32 %v499, %v498
      %v501 = vmul.f32 %v500, %v499
      %v502 = vmul.f32 0.5, %v501
      %v503 = vsub.f32 1.5, %v502
      %v504 = vmul.f32 %v499, %v503
      %vm505 = vweird.f32 %v498
      %vm506 = vweird.f32 %v499
      %vm507 = vmor %vm505, %vm506
      %v508 = vsel %vm507, %v499, %v504
      %v509 = vmul.f32 %v496, %v508
      %v510 = vmul.f32 %v497, %v508
      %v511 = vmax.f32 %v509, 0.0
      %v512 = vmax.f32 %v510, 0.0
      %v513 = vld [vmem:[%s3] sm:$0xff]
      %v514 = vld [vmem:[%s4] sm:$0xff]
      %515 = vrot.lane.b32.xlu0 %v511, 17
      %v516 = vpop.permute.xlu0 %515
      %517 = vrot.lane.b32.xlu0 %v512, 17
      %v518 = vpop.permute.xlu0 %517
      %v519 = vsel %vm271, %v516, %v518
      %v520 = vsel %vm271, %v518, %v516
      %v521 = vmul.f32 %v520, %v274
      %v522 = vmul.f32 %v519, %v275
      %523 = vrot.lane.b32.xlu0 %v511, 16
      %v524 = vpop.permute.xlu0 %523
      %525 = vrot.lane.b32.xlu0 %v512, 16
      %v526 = vpop.permute.xlu0 %525
      %v527 = vsel %vm287, %v524, %v526
      %v528 = vsel %vm287, %v526, %v524
      %v529 = vmul.f32 %v528, %v290
      %v530 = vmul.f32 %v527, %v291
      %531 = vrot.lane.b32.xlu0 %v511, 15
      %v532 = vpop.permute.xlu0 %531
      %533 = vrot.lane.b32.xlu0 %v512, 15
      %v534 = vpop.permute.xlu0 %533
      %v535 = vsel %vm303, %v532, %v534
      %v536 = vsel %vm303, %v534, %v532
      %v537 = vmul.f32 %v536, %v306
      %v538 = vmul.f32 %v535, %v307
      %539 = vrot.lane.b32.xlu0 %v511, 1
      %v540 = vpop.permute.xlu0 %539
      %541 = vrot.lane.b32.xlu0 %v512, 1
      %v542 = vpop.permute.xlu0 %541
      %v543 = vsel %vm319, %v540, %v542
      %v544 = vsel %vm319, %v542, %v540
      %v545 = vmul.f32 %v544, %v322
      %v546 = vmul.f32 %v543, %v323
      %547 = vrot.lane.b32.xlu0 %v511, 127
      %v548 = vpop.permute.xlu0 %547
      %549 = vrot.lane.b32.xlu0 %v512, 127
      %v550 = vpop.permute.xlu0 %549
      %v551 = vsel %vm335, %v548, %v550
      %v552 = vsel %vm335, %v550, %v548
      %v553 = vmul.f32 %v551, %v338
      %v554 = vmul.f32 %v552, %v339
      %555 = vrot.lane.b32.xlu0 %v511, 113
      %v556 = vpop.permute.xlu0 %555
      %557 = vrot.lane.b32.xlu0 %v512, 113
      %v558 = vpop.permute.xlu0 %557
      %v559 = vsel %vm351, %v556, %v558
      %v560 = vsel %vm351, %v558, %v556
      %v561 = vmul.f32 %v559, %v354
      %v562 = vmul.f32 %v560, %v355
      %563 = vrot.lane.b32.xlu0 %v511, 112
      %v564 = vpop.permute.xlu0 %563
      %565 = vrot.lane.b32.xlu0 %v512, 112
      %v566 = vpop.permute.xlu0 %565
      %v567 = vsel %vm367, %v564, %v566
      %v568 = vsel %vm367, %v566, %v564
      %v569 = vmul.f32 %v567, %v370
      %v570 = vmul.f32 %v568, %v371
      %571 = vrot.lane.b32.xlu0 %v511, 111
      %v572 = vpop.permute.xlu0 %571
      %573 = vrot.lane.b32.xlu0 %v512, 111
      %v574 = vpop.permute.xlu0 %573
      %v575 = vsel %vm383, %v572, %v574
      %v576 = vsel %vm383, %v574, %v572
      %v577 = vmul.f32 %v575, %v386
      %v578 = vmul.f32 %v576, %v387
      %580 = vset.pattern.permute.xlu0 0
      %581 = vperm.xlu0 %580, %v514
      %v582 = vpop.permute.xlu0 %581
      %vm584 = vcmask 588800
      %v586 = vsel %vm584, %v513, 0
      %588 = vmatpush.msra.mxu0 0.0
      %589 = vmatpush.msra.mxu0 0.0
      %590 = vmatpush.msra.mxu0 0.0
      %591 = vmatpush.msra.mxu0 0.0
      %592 = vmatpush.msra.mxu0 0.0
      %593 = vmatpush.msra.mxu0 0.0
      %594 = vmatpush.msra.mxu0 0.0
      %595 = vmatpush.msra.mxu0 %v577
      %596 = vmatpush.msra.mxu0 %v569
      %597 = vmatpush.msra.mxu0 %v561
      %598 = vmatpush.msra.mxu0 %v553
      %599 = vmatpush.msra.mxu0 %v511
      %600 = vmatpush.msra.mxu0 %v545
      %601 = vmatpush.msra.mxu0 %v537
      %602 = vmatpush.msra.mxu0 %v529
      %603 = vmatpush.msra.mxu0 %v521
      %604 = vmatmul.f32.gmra.mxu0 %v586
      %v605 = vpop.f32.mrf.mxu0
      %v606 = vadd.f32 %v582, %v605
      %607 = vdwg.mxu0
      %608 = vmatpush.msra.mxu0 0.0
      %609 = vmatpush.msra.mxu0 0.0
      %610 = vmatpush.msra.mxu0 0.0
      %611 = vmatpush.msra.mxu0 0.0
      %612 = vmatpush.msra.mxu0 0.0
      %613 = vmatpush.msra.mxu0 0.0
      %614 = vmatpush.msra.mxu0 0.0
      %615 = vmatpush.msra.mxu0 %v578
      %616 = vmatpush.msra.mxu0 %v570
      %617 = vmatpush.msra.mxu0 %v562
      %618 = vmatpush.msra.mxu0 %v554
      %619 = vmatpush.msra.mxu0 %v512
      %620 = vmatpush.msra.mxu0 %v546
      %621 = vmatpush.msra.mxu0 %v538
      %622 = vmatpush.msra.mxu0 %v530
      %623 = vmatpush.msra.mxu0 %v522
      %624 = vmatmul.f32.gmra.mxu0 %v586
      %v625 = vpop.f32.mrf.mxu0
      %v626 = vadd.f32 %v582, %v625
      %627 = vdwg.mxu0
      %v628 = vadd.f32 %v606, %v626
      %629 = vadd.xlane.f32.xlu0 %v628
      %v630 = vpop.xlane.xlu0 %629
      %v631 = vmul.f32 %v606, %v606
      %v632 = vmul.f32 %v626, %v626
      %v633 = vadd.f32 %v631, %v632
      %634 = vadd.xlane.f32.xlu0 %v633
      %v635 = vpop.xlane.xlu0 %634
      %v636 = vmul.f32 %v630, 0.00390625
      %v637 = vmul.f32 %v635, 0.00390625
      %v638 = vmul.f32 %v636, %v636
      %v639 = vsub.f32 %v637, %v638
      %v640 = vmax.f32 %v639, 0.0
      %v641 = vsub.f32 %v606, %v636
      %v642 = vsub.f32 %v626, %v636
      %v643 = vadd.f32 %v640, 1e-05
      %v644 = vrsqrt.pop %v643
      %v645 = vmul.f32 %v644, %v643
      %v646 = vmul.f32 %v645, %v644
      %v647 = vmul.f32 0.5, %v646
      %v648 = vsub.f32 1.5, %v647
      %v649 = vmul.f32 %v644, %v648
      %vm650 = vweird.f32 %v643
      %vm651 = vweird.f32 %v644
      %vm652 = vmor %vm650, %vm651
      %v653 = vsel %vm652, %v644, %v649
      %v654 = vmul.f32 %v641, %v653
      %v655 = vmul.f32 %v642, %v653
      %v656 = vmax.f32 %v654, 0.0
      %v657 = vmax.f32 %v655, 0.0
      %658 = vst [vmem:[%s251] sm:$0xff] %v656
      %659 = vst [vmem:[%s251 + $0x8] sm:$0xff] %v657
      %p660 = scmp.lt.s32.totalorder %s17, 1
      %s661 = scalar_select %p660, %s17, 1
      %s662 = smul.addr %s661, 2
      %s663 = smul.addr %s662, 8
      %s664 = scalar_lea.vmem %s6, %s663
      // Predicated region
      $region45: #{conv_block_forward.1} parent=43 // pred_check
        %p665 = pneg %p166
      $region46: #{conv_block_forward.1} parent=43 // pred_check_branch
        %667 = sbr.rel (%p665) target = $region48
      $region47: #{conv_block_forward.1} parent=43 // pred_region
        _
      $region48: #{conv_block_forward.1} parent=43 // pred_fallthru
        _
    $region44: #{conv_block_forward.1} parent=5 // pred_fallthru
      _
    %p668 = scmp.le.s32.totalorder 2, %s12
    // Predicated region
    $region49: #{conv_block_forward.1} parent=5 // pred_check
      %p669 = pneg %p668
    $region50: #{conv_block_forward.1} parent=5 // pred_check_branch
      %671 = sbr.rel (%p669) target = $region52
    $region51: #{conv_block_forward.1} parent=5 // pred_region
      %s672 = ssub.s32 %s12, 2
      // Predicated region
      $region53: #{conv_block_forward.1} parent=51 // pred_check
        %p673 = pneg %p172
      $region54: #{conv_block_forward.1} parent=51 // pred_check_branch
        %675 = sbr.rel (%p673) target = $region56
      $region55: #{conv_block_forward.1} parent=51 // pred_region
        %p676 = scmp.lt.s32.totalorder %s18, 1
        %s677 = scalar_select %p676, %s18, 1
        %s678 = smul.addr %s677, 2
        %s679 = smul.addr %s678, 8
        %s680 = scalar_lea.vmem %s6, %s679
      $region56: #{conv_block_forward.1} parent=51 // pred_fallthru
        _
    $region52: #{conv_block_forward.1} parent=5 // pred_fallthru
      _
  $region6: #{conv_block_forward.1} parent=0 // loop_footer
    %s16 = sadd.s32 1, %s12
  $region7: #{conv_block_forward.1} parent=0 // loop_footer_branch
    %11 = sbr.rel target = $region3
  $region8: #{conv_block_forward.1} parent=0 // loop_exit
    _

</llo_original>
